<compile_context>
chip_gen: v7x
topology: tpu7x:2x2x1
jax: 0.10.0
libtpu: 0.0.40
codegen_flags: <defaults>
</compile_context>

<pallas_src>
import functools

import jax
import jax.numpy as jnp
from jax import lax
from jax.experimental import pallas as pl
from jax.experimental.pallas import tpu as pltpu


# --------------------------------------------------------------------------- #
# pltpu.roll direction probe (one tiny kernel, cached): returns sign s so that
# pltpu.roll(x, s * k, axis=-1)[..., i] == x[..., i + k].
# --------------------------------------------------------------------------- #
@functools.lru_cache(maxsize=None)
def _roll_shift_sign():
    def kern(x_ref, o_ref):
        o_ref[...] = pltpu.roll(x_ref[...], 1, axis=1)

    x = jnp.tile(jnp.arange(128, dtype=jnp.float32)[None, :], (8, 1))
    y = pl.pallas_call(
        kern, out_shape=jax.ShapeDtypeStruct((8, 128), jnp.float32))(x)
    # jnp.roll convention: y[0, 0] == x[0, 127] == 127 -> need shift = -k.
    return -1 if float(y[0, 0]) == 127.0 else 1


def _compiler_params(est_bytes):
    # Scoped-VMEM limit from the actual working set (2x headroom), capped below
    # the smallest physical VMEM (v7x: 64 MiB).
    limit = int(min(max(2 * est_bytes, 32 << 20), 48 << 20))
    return pltpu.CompilerParams(
        dimension_semantics=("parallel", "parallel"),
        vmem_limit_bytes=limit)


def _pick_block_d(D, cap):
    for t in range(min(cap, D), 0, -1):
        if D % t == 0:
            return t
    return 1


# ----------------- fused (prev BN+PReLU) -> conv3d 3x3x3 kernel ------------ #
def _make_conv_kernel(Td, H, W, Cin, Cout, roll_sign):
    HW = H * W

    def kernel(x_lo_ref, x_mid_ref, x_hi_ref, w_ref, b_ref,
               scale_ref, shift_ref, alpha_ref,
               o_ref, sum_ref, sq_ref):
        # x_lo/x_mid/x_hi : (1,1,Cin,HW) / (1,Td,Cin,HW) / (1,1,Cin,HW) raw
        # w_ref : (3, Cout, 9*Cin) bf16, taps ordered (kh, kw, cin)
        # b_ref : (Cout, 1) f32;  scale/shift/alpha : (Cin, 1) f32 (prev stage)
        # o_ref : (1, Td, Cout, HW) f32 raw conv output (lane-dense)
        # sum_ref/sq_ref : (1, 1, Cout, 1) per-(n, d-block) BN partial sums
        i = pl.program_id(1)
        nblk = pl.num_programs(1)

        scale = scale_ref[...]
        shift = shift_ref[...]
        alpha = alpha_ref[...]

        def activate(raw):                      # (T, Cin, HW) f32 -> bf16
            z = raw * scale + shift
            return jnp.where(z >= 0, z, alpha * z).astype(jnp.bfloat16)

        lo = activate(x_lo_ref[0])              # (1, Cin, HW)
        mid = activate(x_mid_ref[0])            # (Td, Cin, HW)
        hi = activate(x_hi_ref[0])              # (1, Cin, HW)
        # Depth halo: the clamped index_map loaded a real slice there, so zero
        # it (conv pads the *activated* tensor with zeros). Keep this a select,
        # not an OOB load.
        lo = jnp.where(i == 0, jnp.zeros_like(lo), lo)
        hi = jnp.where(i == nblk - 1, jnp.zeros_like(hi), hi)
        act = jnp.concatenate([lo, mid, hi], axis=0)   # (Td+2, Cin, HW) bf16

        # roll-based im2col: one lane roll + mask per (kh, kw) tap, applied to
        # the whole depth window at once -> (Td+2, 9*Cin, HW).
        hw_idx = lax.broadcasted_iota(jnp.int32, (1, 1, HW), 2)
        hh = hw_idx // W
        ww = hw_idx % W
        pieces = []
        for kh in range(3):
            for kw in range(3):
                dh, dw = kh - 1, kw - 1
                s = dh * W + dw
                if s == 0:
                    shifted = act
                else:
                    shifted = pltpu.roll(act, (roll_sign * s) % HW, axis=2)
                valid = ((hh + dh >= 0) & (hh + dh < H) &
                         (ww + dw >= 0) & (ww + dw < W))
                pieces.append(shifted * valid.astype(jnp.bfloat16))
        rhs_all = jnp.concatenate(pieces, axis=1)      # (Td+2, 9*Cin, HW)

        w_all = w_ref[...]                             # (3, Cout, 9*Cin) bf16
        bias = b_ref[...]                              # (Cout, 1) f32

        ch_sum = jnp.zeros((Cout, 1), jnp.float32)
        ch_sq = jnp.zeros((Cout, 1), jnp.float32)
        for td in range(Td):
            acc = jnp.zeros((Cout, HW), jnp.float32)
            for kd in range(3):                        # 3 accumulated MXU dots
                acc = acc + jnp.dot(w_all[kd], rhs_all[td + kd],
                                    preferred_element_type=jnp.float32)
            y = acc + bias                             # (Cout, HW) f32
            o_ref[0, td] = y                           # lane-dense store
            ch_sum = ch_sum + jnp.sum(y, axis=1, keepdims=True)
            ch_sq = ch_sq + jnp.sum(y * y, axis=1, keepdims=True)
        sum_ref[0, 0] = ch_sum
        sq_ref[0, 0] = ch_sq

    return kernel


def conv3x3x3_fused(x, w_k, b, in_scale, in_shift, in_alpha, *, block_d, H, W):
    """3x3x3 / stride 1 / pad 1 conv of PReLU(BN(x)), with the previous stage's
    BN/PReLU applied on the fly (identity for stage 0).

    x: (N, D, Cin, H*W) raw previous-stage output; w_k: (3, Cout, 9*Cin) bf16;
    b: (Cout, 1); in_scale/in_shift/in_alpha: (Cin, 1).
    Returns (y, sum_nd, sq_nd): y (N, D, Cout, H*W) raw conv output and
    per-(n, d-block) channel sums / sums of squares, shape (N, D//Td, Cout, 1).
    """
    N, D, Cin, HW = x.shape
    assert HW == H * W
    Cout = w_k.shape[1]
    Td = block_d
    assert D % Td == 0
    nblk = D // Td
    kernel = _make_conv_kernel(Td, H, W, Cin, Cout, _roll_shift_sign())

    in_specs = [
        # clamped depth-window halos (block depth 1 => block index == element)
        pl.BlockSpec((1, 1, Cin, HW),
                     lambda n, i: (n, jnp.maximum(i * Td - 1, 0), 0, 0)),
        pl.BlockSpec((1, Td, Cin, HW), lambda n, i: (n, i, 0, 0)),
        pl.BlockSpec((1, 1, Cin, HW),
                     lambda n, i: (n, jnp.minimum(i * Td + Td, D - 1), 0, 0)),
        pl.BlockSpec((3, Cout, 9 * Cin), lambda n, i: (0, 0, 0)),
        pl.BlockSpec((Cout, 1), lambda n, i: (0, 0)),
        pl.BlockSpec((Cin, 1), lambda n, i: (0, 0)),
        pl.BlockSpec((Cin, 1), lambda n, i: (0, 0)),
        pl.BlockSpec((Cin, 1), lambda n, i: (0, 0)),
    ]
    out_specs = (
        pl.BlockSpec((1, Td, Cout, HW), lambda n, i: (n, i, 0, 0)),
        pl.BlockSpec((1, 1, Cout, 1), lambda n, i: (n, i, 0, 0)),
        pl.BlockSpec((1, 1, Cout, 1), lambda n, i: (n, i, 0, 0)),
    )
    out_shape = (
        jax.ShapeDtypeStruct((N, D, Cout, HW), jnp.float32),
        jax.ShapeDtypeStruct((N, nblk, Cout, 1), jnp.float32),
        jax.ShapeDtypeStruct((N, nblk, Cout, 1), jnp.float32),
    )
    est = (2 * ((Td + 2) * Cin * HW * 4 + Td * Cout * HW * 4)
           + 24 * (Td + 2) * Cin * HW * 2 + 3 * Cout * 9 * Cin * 2 + (1 << 20))
    return pl.pallas_call(
        kernel,
        grid=(N, nblk),
        in_specs=in_specs,
        out_specs=out_specs,
        out_shape=out_shape,
        compiler_params=_compiler_params(est),
    )(x, x, x, w_k, b, in_scale, in_shift, in_alpha)


# -------------- final-stage BN + PReLU: lane-dense elementwise -------------- #
def _bn_prelu_kernel(y_ref, scale_ref, shift_ref, alpha_ref, o_ref):
    z = y_ref[...] * scale_ref[...] + shift_ref[...]   # (C,1) broadcast in-kernel
    o_ref[...] = jnp.where(z >= 0, z, alpha_ref[...] * z)


def bn_prelu(y, scale, shift, alpha, *, block_d):
    """y: (N, D, C, H*W) f32; scale/shift/alpha: (C, 1) f32."""
    N, D, C, HW = y.shape
    Td = block_d
    assert D % Td == 0
    est = 4 * Td * C * HW * 4 + (1 << 20)
    return pl.pallas_call(
        _bn_prelu_kernel,
        grid=(N, D // Td),
        in_specs=[pl.BlockSpec((1, Td, C, HW), lambda n, i: (n, i, 0, 0)),
                  pl.BlockSpec((C, 1), lambda n, i: (0, 0)),
                  pl.BlockSpec((C, 1), lambda n, i: (0, 0)),
                  pl.BlockSpec((C, 1), lambda n, i: (0, 0))],
        out_specs=pl.BlockSpec((1, Td, C, HW), lambda n, i: (n, i, 0, 0)),
        out_shape=jax.ShapeDtypeStruct((N, D, C, HW), jnp.float32),
        compiler_params=_compiler_params(est),
    )(y, scale, shift, alpha)


# ------------------------------- full stage -------------------------------- #
def decoder_stage_forward(x_ncdhw, params, eps=1e-5, block_d=4):
    """(Conv3d(3,1,1) -> BatchNorm3d(training stats) -> PReLU) x 3, NCDHW in/out."""
    N, cin, D, H, W = x_ncdhw.shape
    HW = H * W
    Td = _pick_block_d(D, block_d)
    x = jnp.transpose(x_ncdhw, (0, 2, 1, 3, 4)).reshape(N, D, cin, HW)
    y = x.astype(jnp.float32)

    # Stage 0 has no preceding BN/PReLU -> identity normalization of the input.
    scale = jnp.ones((cin, 1), jnp.float32)
    shift = jnp.zeros((cin, 1), jnp.float32)
    alpha = jnp.ones((cin, 1), jnp.float32)

    count = float(N * D * H * W)
    for p in params:
        w5 = p["w"]                                   # (3,3,3,cin,cout)
        cout = w5.shape[-1]
        w_k = jnp.transpose(w5.reshape(3, 9 * cin, cout),
                            (0, 2, 1)).astype(jnp.bfloat16)
        b = p["b"].reshape(cout, 1).astype(jnp.float32)
        y, sum_nd, sq_nd = conv3x3x3_fused(
            y, w_k, b, scale, shift, alpha, block_d=Td, H=H, W=W)
        # training-mode BatchNorm3d: biased batch statistics over (N, D, H, W);
        # tiny cross-(N, d-block) reduction in plain JAX (keeps both grid axes
        # "parallel" in the kernel).
        mean = jnp.sum(sum_nd, axis=(0, 1, 3)) / count                 # (cout,)
        var = jnp.sum(sq_nd, axis=(0, 1, 3)) / count - mean * mean
        # TODO(synk): switch to a shifted/Welford reduction for large volumes.
        var = jnp.maximum(var, 0.0)
        invstd = lax.rsqrt(var + eps)
        gamma, beta = p["gamma"], p["beta"]
        scale = (gamma * invstd).reshape(cout, 1)
        shift = (beta - gamma * mean * invstd).reshape(cout, 1)
        alpha = p["alpha"].reshape(cout, 1)
        cin = cout

    # Final stage's BN + PReLU (no consumer conv to fuse it into).
    out = bn_prelu(y, scale, shift, alpha, block_d=Td)                 # (N,D,C,HW)
    out = out.reshape(N, D, cin, H, W).transpose(0, 2, 1, 3, 4)        # NCDHW
    return out


# ------------------------- deterministic parameters ------------------------ #
def init_params(key, ch_in, ch_out):
    params = []
    cin = ch_in
    for _ in range(3):
        key, k1, k2, k3, k4 = jax.random.split(key, 5)
        params.append(dict(
            w=jax.random.normal(k1, (3, 3, 3, cin, ch_out), jnp.float32) * 0.1,
            b=jax.random.normal(k2, (ch_out,), jnp.float32) * 0.05,
            gamma=1.0 + 0.1 * jax.random.normal(k3, (ch_out,), jnp.float32),
            beta=0.05 * jax.random.normal(k4, (ch_out,), jnp.float32),
            alpha=jnp.full((ch_out,), 0.25, jnp.float32),  # nn.PReLU default
        ))
        cin = ch_out
    return params


# ------------------------------ pure-JAX ref ------------------------------- #
def reference_forward(x_ncdhw, params, eps=1e-5, operand_dtype=jnp.bfloat16):
    """Same math as the PyTorch module; conv operands rounded to `operand_dtype`
    (bf16) to match the kernel's MXU input precision, accumulation in f32."""
    x = jnp.transpose(x_ncdhw, (0, 2, 3, 4, 1)).astype(jnp.float32)
    for p in params:
        w = p["w"].astype(operand_dtype).astype(jnp.float32)
        xin = x.astype(operand_dtype).astype(jnp.float32)
        y = lax.conv_general_dilated(
            xin, w, window_strides=(1, 1, 1), padding=((1, 1),) * 3,
            dimension_numbers=("NDHWC", "DHWIO", "NDHWC"),
            precision=lax.Precision.HIGHEST)
        y = y + p["b"]
        mean = jnp.mean(y, axis=(0, 1, 2, 3))
        var = jnp.mean((y - mean) ** 2, axis=(0, 1, 2, 3))
        z = p["gamma"] * (y - mean) / jnp.sqrt(var + eps) + p["beta"]
        x = jnp.where(z >= 0, z, p["alpha"] * z)
    return jnp.transpose(x, (0, 4, 1, 2, 3))


if __name__ == "__main__":
    key = jax.random.PRNGKey(0)
    k_x, k_p = jax.random.split(key)

    N, ch_in, ch_out = 2, 4, 8
    D, H, W = 8, 16, 16                  # H*W = 256 -> lane-dense tiles
    x = jax.random.normal(k_x, (N, ch_in, D, H, W), jnp.float32)   # NCDHW
    params = init_params(k_p, ch_in, ch_out)

    out = decoder_stage_forward(x, params, block_d=4)
    out = jax.block_until_ready(out)
    assert out.shape == (N, ch_out, D, H, W), out.shape

    ref = reference_forward(x, params)   # bf16-matched operands, f32 accumulation
    err = float(jnp.max(jnp.abs(out - ref)))
    assert jnp.allclose(out, ref, atol=2e-2, rtol=2e-2), f"max abs err {err}"

    print("KERNEL_OK")
</pallas_src>

<mosaic_0001>
module attributes {stable_mosaic.version = 11 : i64} {
  func.func @kern(%arg0: memref<8x128xf32, #tpu.memory_space<vmem>>, %arg1: memref<8x128xf32, #tpu.memory_space<vmem>>) attributes {dimension_semantics = [], scalar_prefetch = 0 : i64, scratch_operands = 0 : i64, tpu.core_type = #tpu.core_type<tc>} {
    %c0 = arith.constant 0 : index
    %c0_0 = arith.constant 0 : index
    %0 = vector.load %arg0[%c0, %c0_0] : memref<8x128xf32, #tpu.memory_space<vmem>>, vector<8x128xf32>
    %c1_i32 = arith.constant 1 : i32
    %1 = tpu.dynamic_rotate %0 by %c1_i32 dim 1 : vector<8x128xf32>, i32 -> vector<8x128xf32>
    %c0_1 = arith.constant 0 : index
    %c0_2 = arith.constant 0 : index
    %2 = vector.load %arg1[%c0_1, %c0_2] : memref<8x128xf32, #tpu.memory_space<vmem>>, vector<8x128xf32>
    tpu.vector_store %arg1[%c0_1, %c0_2], %1 {strides = array<i32>} : memref<8x128xf32, #tpu.memory_space<vmem>>, vector<8x128xf32>,
    return
  }
}

</mosaic_0001>

<llo_original>
// kernel: tpu_custom_call.1
$region0: #{tpu_custom_call.1}
  #allocation0 [shape = 'u32[]', space=smem, size = 0x4, offset = 0x4, fixed_abs, tag = 'smem constant byte address 0x4 - core index']
  #allocation1 [shape = 'u32[144,128]{1,0:T(1,128)}', space=vmem, size = 0x12000, scoped, tag = 'internal scratch']
  %s0 = inlined_call_operand.hbm [shape: f32[8,128], index: 0, kind: input, shape index: {}]
  %s1 = inlined_call_operand.hbm [shape: f32[8,128], index: 1, kind: output, shape index: {}]
  %s2 = sld [smem:[#allocation0]]
  $region18: #{tpu_custom_call.1} parent=0
    _
  %s4 = ssub.s32 1, %s2
  %s5 = scalar_select 0, %s4, %s2
  $region1: #{tpu_custom_call.1} parent=0
    #allocation2 [shape = 'u8[4096]{0}', space=vmem, size = 0x1000, scoped, tag = 'input window, operand 0, single buffered']
    #allocation3 [shape = 's32[1]{0}', space=sflag, size = 0x4, scoped, tag = 'scoped memory for tpu_custom_call.1']
    #allocation4 [shape = 's32[1]{0}', space=sflag, size = 0x4, scoped, tag = 'scoped memory for tpu_custom_call.1']
    #allocation5 [shape = 'u8[4096]{0}', space=vmem, size = 0x1000, scoped, tag = 'output window, operand 0, single buffered']
    %6 = vsyncpa [#allocation3], 0
    %7 = vsyncpa [#allocation4], 0
    // Predicated region
    $region2: #{tpu_custom_call.1} parent=1 // pred_check
      _
    $region3: #{tpu_custom_call.1} parent=1 // pred_check_branch
      %9 = sbr.rel (0) target = $region5
    $region4: #{tpu_custom_call.1} parent=1 // pred_region
      %s11 = ssub.s32 128, 128
      %12 = vsyncadd [#allocation3], %s11
      %s14 = sshll.u32 [#allocation2], 4
      %s15 = int_to_ptr.vmem [resolvable:$true] %s14
      %17 = dma.hbm_to_vmem [thread:$0]  %s0, 128, %s15, [#allocation3]
    $region5: #{tpu_custom_call.1} parent=1 // pred_fallthru
      _
    // Predicated region
    $region6: #{tpu_custom_call.1} parent=1 // pred_check
      _
    $region7: #{tpu_custom_call.1} parent=1 // pred_check_branch
      %19 = sbr.rel (0) target = $region9
    $region8: #{tpu_custom_call.1} parent=1 // pred_region
      %20 = dma.done [#allocation3], 128
    $region9: #{tpu_custom_call.1} parent=1 // pred_fallthru
      _
    %v21 = vld [vmem:[#allocation2] sm:$0xff]
    %22 = vrot.lane.b32.xlu0 %v21, 1
    %v23 = vpop.permute.xlu0 %22
    %24 = vst [vmem:[#allocation5] sm:$0xff] %v23
    // Predicated region
    $region10: #{tpu_custom_call.1} parent=1 // pred_check
      _
    $region11: #{tpu_custom_call.1} parent=1 // pred_check_branch
      %26 = sbr.rel (0) target = $region13
    $region12: #{tpu_custom_call.1} parent=1 // pred_region
      %s28 = ssub.s32 128, 128
      %29 = vsyncadd [#allocation4], %s28
      %s31 = sshll.u32 [#allocation5], 4
      %s32 = int_to_ptr.vmem [resolvable:$true] %s31
      %34 = dma.vmem_to_hbm [thread:$0]  %s32, 128, %s1, [#allocation4]
    $region13: #{tpu_custom_call.1} parent=1 // pred_fallthru
      _
    // Predicated region
    $region14: #{tpu_custom_call.1} parent=1 // pred_check
      _
    $region15: #{tpu_custom_call.1} parent=1 // pred_check_branch
      %36 = sbr.rel (0) target = $region17
    $region16: #{tpu_custom_call.1} parent=1 // pred_region
      %37 = dma.done [#allocation4], 128
    $region17: #{tpu_custom_call.1} parent=1 // pred_fallthru
      _
    %38 = vsyncpa [#allocation3], 1
    %39 = vsyncpa [#allocation4], 1

</llo_original>
